<compile_context>
chip_gen: v6e
topology: v6e:2x2x1
jax: 0.10.0
libtpu: 0.0.40
codegen_flags: <defaults>
</compile_context>

<pallas_src>
import itertools

import numpy as np
import jax
import jax.numpy as jnp
from jax.experimental import pallas as pl
from jax.experimental.pallas import tpu as pltpu


# ----------------------------------------------------------------------------
# Minimal GeometricAlgebra blade bookkeeping (host-side numpy glue).
# Blade ordering matches tfga/torchga: combinations sorted by degree, then lex.
# ----------------------------------------------------------------------------
def build_algebra(metric):
    n = len(metric)
    blades = []
    for deg in range(n + 1):
        for combo in itertools.combinations(range(n), deg):
            blades.append(combo)
    degrees = np.array([len(b) for b in blades], dtype=np.int32)
    return blades, degrees


def kind_blade_indices(degrees, kind, max_degree):
    if kind == "mv":
        mask = np.ones_like(degrees, dtype=bool)
    elif kind == "scalar":
        mask = degrees == 0
    elif kind == "vector":
        mask = degrees == 1
    elif kind == "bivector":
        mask = degrees == 2
    elif kind == "trivector":
        mask = degrees == 3
    elif kind == "pseudoscalar":
        mask = degrees == max_degree
    elif kind == "even":
        mask = degrees % 2 == 0
    elif kind == "odd":
        mask = degrees % 2 == 1
    else:
        raise ValueError(f"unknown blade kind: {kind}")
    return np.nonzero(mask)[0].astype(np.int32)


def _round_up(a, b):
    return pl.cdiv(a, b) * b


# ----------------------------------------------------------------------------
# Pallas kernel: folded rows of kind-components @ block-diagonal one-hot S.
# ----------------------------------------------------------------------------
def _scatter_matmul_kernel(x_ref, s_ref, o_ref):
    # x_ref: (TM, G*K), s_ref: (G*K, G*NUM_BLADES), o_ref: (TM, G*NUM_BLADES)
    o_ref[...] = jnp.dot(
        x_ref[...], s_ref[...], preferred_element_type=jnp.float32
    ).astype(o_ref.dtype)


def tensor_with_kind_to_geometric(x, metric, kind, *, tm=2048):
    """Pallas implementation of algebra.from_tensor_with_kind(x, kind)."""
    blades, degrees = build_algebra(metric)
    num_blades = len(blades)
    idx = kind_blade_indices(degrees, kind, max_degree=len(metric))
    k = int(idx.shape[0])
    assert x.shape[-1] == k, (
        f"expected last dim {k} for kind '{kind}', got {x.shape[-1]}"
    )

    batch_shape = x.shape[:-1]
    m = int(np.prod(batch_shape)) if batch_shape else 1

    itemsize = jnp.dtype(x.dtype).itemsize
    pack = max(1, 4 // itemsize)       # sublane packing of narrow dtypes
    min_tile = 8 * pack                # minimum legal row-tile

    # Base fold factor so the output last dim is (at least) 128.
    G0 = max(1, 128 // num_blades)

    # Fallbacks: tiny batches (launch/pad overhead dominates) and non-float
    # dtypes (one-hot matmul on the MXU is float-only across all generations).
    if (not jnp.issubdtype(x.dtype, jnp.floating)) or pl.cdiv(m, G0) < min_tile:
        out = jnp.zeros(batch_shape + (num_blades,), x.dtype)
        return out.at[..., jnp.asarray(idx)].set(x)

    # Widen the fold for large batches (keep G a multiple of G0) so the output
    # slab reaches up to 512 lanes (bigger unmasked vst runs, 256-wide-MXU
    # friendly, denser input tile), capped so >=4 tiles of >=min_tile rows
    # remain (pipelining + v7x dual-TC sharding) and VMEM stays modest.
    nw0 = G0 * num_blades
    G = G0
    f = max(1, 512 // nw0)
    while f > 1:
        if pl.cdiv(m, G0 * f) >= 4 * min_tile:
            G = G0 * f
            break
        f //= 2

    kw = G * k            # folded input width
    nw = G * num_blades   # folded output width (128..512)
    m_folded = pl.cdiv(m, G)

    # Row tile: big (amortizes the ~0.35us per-step overhead) but clamped so
    # the grid keeps ~4 steps; narrow dtypes get proportionally more rows.
    tm_rows = tm * pack
    tm_eff = max(min_tile, min(tm_rows, _round_up(pl.cdiv(m_folded, 4), min_tile)))
    mp = _round_up(m_folded, tm_eff)
    grid_steps = mp // tm_eff

    # Block-diagonal one-hot selection matrix, built once with numpy.
    sel_np = np.zeros((kw, nw), dtype=np.float32)
    for g in range(G):
        sel_np[g * k + np.arange(k), g * num_blades + idx] = 1.0
    sel = jnp.asarray(sel_np, dtype=x.dtype)

    # Single fused pad: flat (m, k) -> (mp * G, k), then fold into (mp, kw).
    x2 = x.reshape(m, k)
    rows_needed = mp * G
    if rows_needed != m:
        x2 = jnp.pad(x2, ((0, rows_needed - m), (0, 0)))
    x2 = x2.reshape(mp, kw)

    # VMEM budget (input tile is lane-padded to a multiple of 128 in VMEM).
    kw_lanes = _round_up(kw, 128)
    vmem_need = (2 * tm_eff * (kw_lanes + nw) + 2 * kw_lanes * nw) * itemsize
    vmem_limit = int(min(max(vmem_need * 3 // 2, 24 * 1024 * 1024),
                         64 * 1024 * 1024))

    bytes_accessed = (mp * kw + kw * nw + mp * nw) * itemsize
    cost = pl.CostEstimate(
        flops=2 * mp * kw * nw, transcendentals=0, bytes_accessed=bytes_accessed
    )

    out = pl.pallas_call(
        _scatter_matmul_kernel,
        out_shape=jax.ShapeDtypeStruct((mp, nw), x.dtype),
        grid_spec=pltpu.PrefetchScalarGridSpec(
            num_scalar_prefetch=0,
            grid=(grid_steps,),
            in_specs=[
                pl.BlockSpec((tm_eff, kw), lambda i: (i, 0)),
                # Constant block index: Pallas re-uses the buffer, DMAs once.
                pl.BlockSpec((kw, nw), lambda i: (0, 0)),
            ],
            out_specs=pl.BlockSpec((tm_eff, nw), lambda i: (i, 0)),
        ),
        compiler_params=pltpu.CompilerParams(
            dimension_semantics=("parallel",),
            vmem_limit_bytes=vmem_limit,
        ),
        cost_estimate=cost,
    )(x2, sel)

    # Unfold: (mp, G*num_blades) -> (mp*G, num_blades) -> drop pad -> batch.
    out = out.reshape(rows_needed, num_blades)[:m]
    return out.reshape(*batch_shape, num_blades)


# ----------------------------------------------------------------------------
# Reference (pure JAX) for correctness check.
# ----------------------------------------------------------------------------
def reference_from_tensor_with_kind(x, metric, kind):
    blades, degrees = build_algebra(metric)
    num_blades = len(blades)
    idx = kind_blade_indices(degrees, kind, max_degree=len(metric))
    out = jnp.zeros(x.shape[:-1] + (num_blades,), x.dtype)
    return out.at[..., jnp.asarray(idx)].set(x)


if __name__ == "__main__":
    # GA(3,0): metric [1,1,1] -> 8 blades, kind="vector" -> 3 components.
    metric = [1.0, 1.0, 1.0]
    kind = "vector"

    key = jax.random.PRNGKey(0)

    # Small shape on the base (nw=128) Pallas path: m=256 rows -> 16 folded
    # rows -> 2 grid steps.  batch=4, seq=64, vector components=3.
    x = jax.random.normal(key, (4, 64, 3), dtype=jnp.float32)
    out = jax.block_until_ready(tensor_with_kind_to_geometric(x, metric, kind))
    ref = reference_from_tensor_with_kind(x, metric, kind)
    assert out.shape == (4, 64, 8), out.shape
    np.testing.assert_allclose(np.asarray(out), np.asarray(ref),
                               atol=1e-6, rtol=1e-6)

    # Larger batch exercises the widened fold (G=64 -> 512-wide output slab,
    # 4 grid steps).  Still small: m = 8*256 = 2048 rows.
    x_wide = jax.random.normal(key, (8, 256, 3), dtype=jnp.float32)
    out_wide = jax.block_until_ready(
        tensor_with_kind_to_geometric(x_wide, metric, kind)
    )
    np.testing.assert_allclose(
        np.asarray(out_wide),
        np.asarray(reference_from_tensor_with_kind(x_wide, metric, kind)),
        atol=1e-6, rtol=1e-6,
    )

    # Tiny shape exercises the documented small-batch fallback path.
    x_small = jax.random.normal(key, (2, 8, 3), dtype=jnp.float32)
    out_small = jax.block_until_ready(
        tensor_with_kind_to_geometric(x_small, metric, kind)
    )
    np.testing.assert_allclose(
        np.asarray(out_small),
        np.asarray(reference_from_tensor_with_kind(x_small, metric, kind)),
        atol=1e-6, rtol=1e-6,
    )

    print("KERNEL_OK")
</pallas_src>

<mosaic_0001>
module attributes {stable_mosaic.version = 11 : i64} {
  func.func @_scatter_matmul_kernel(%arg0: i32, %arg1: memref<8x48xf32, #tpu.memory_space<vmem>>, %arg2: memref<48x128xf32, #tpu.memory_space<vmem>>, %arg3: memref<8x128xf32, #tpu.memory_space<vmem>>) attributes {dimension_semantics = [#tpu.dimension_semantics<parallel>], iteration_bounds = array<i64: 2>, scalar_prefetch = 0 : i64, scratch_operands = 0 : i64, tpu.core_type = #tpu.core_type<tc>, window_params = [{transform_indices = @transform_0, window_bounds = array<i64: 8, 48>}, {pipeline_mode = #tpu.pipeline_mode<synchronous>, transform_indices = @transform_1, window_bounds = array<i64: 48, 128>}, {transform_indices = @transform_2, window_bounds = array<i64: 8, 128>}]} {
    %c0 = arith.constant 0 : index
    %c0_0 = arith.constant 0 : index
    %0 = vector.load %arg1[%c0, %c0_0] : memref<8x48xf32, #tpu.memory_space<vmem>>, vector<8x48xf32>
    %c0_1 = arith.constant 0 : index
    %c0_2 = arith.constant 0 : index
    %1 = vector.load %arg2[%c0_1, %c0_2] : memref<48x128xf32, #tpu.memory_space<vmem>>, vector<48x128xf32>
    %cst = arith.constant dense<0.000000e+00> : vector<8x128xf32>
    %2 = tpu.matmul %0, %1, %cst {dimension_numbers = #tpu.dot_dimension_numbers<[1], [0], [0], [1], [0, 0, 1, 1], [], []>} : vector<8x48xf32>, vector<48x128xf32>, vector<8x128xf32> -> vector<8x128xf32>
    %c0_3 = arith.constant 0 : index
    %c0_4 = arith.constant 0 : index
    %3 = vector.load %arg3[%c0_3, %c0_4] : memref<8x128xf32, #tpu.memory_space<vmem>>, vector<8x128xf32>
    tpu.vector_store %arg3[%c0_3, %c0_4], %2 {strides = array<i32>} : memref<8x128xf32, #tpu.memory_space<vmem>>, vector<8x128xf32>,
    return
  }
  func.func @transform_0(%arg0: i32) -> (i32, i32) {
    %c0_i32 = arith.constant 0 : i32
    %c0_i32_0 = arith.constant 0 : i32
    return %arg0, %c0_i32 : i32, i32
  }
  func.func @transform_1(%arg0: i32) -> (i32, i32) {
    %c0_i32 = arith.constant 0 : i32
    %c0_i32_0 = arith.constant 0 : i32
    %c0_i32_1 = arith.constant 0 : i32
    return %c0_i32, %c0_i32_0 : i32, i32
  }
  func.func @transform_2(%arg0: i32) -> (i32, i32) {
    %c0_i32 = arith.constant 0 : i32
    %c0_i32_0 = arith.constant 0 : i32
    return %arg0, %c0_i32 : i32, i32
  }
}

</mosaic_0001>

<llo_original>
// kernel: tpu_custom_call.1
$region0: #{tpu_custom_call.1}
  #allocation0 [shape = 'u32[]', space=smem, size = 0x4, offset = 0x4, fixed_abs, tag = 'smem constant byte address 0x4 - core index']
  #allocation1 [shape = 'u32[144,128]{1,0:T(1,128)}', space=vmem, size = 0x12000, scoped, tag = 'internal scratch']
  %s0 = inlined_call_operand.hbm [shape: f32[16,48], index: 0, kind: input, shape index: {}]
  %s1 = inlined_call_operand.hbm [shape: f32[48,128], index: 1, kind: input, shape index: {}]
  %s2 = inlined_call_operand.hbm [shape: f32[16,128], index: 2, kind: output, shape index: {}]
  %s3 = sld [smem:[#allocation0]]
  $region49: #{tpu_custom_call.1} parent=0
    _
  %s5 = ssub.s32 1, %s3
  %s6 = scalar_select 0, %s5, %s3
  $region1: #{tpu_custom_call.1} parent=0
    #allocation2 [shape = 'u8[8192]{0}', space=vmem, size = 0x2000, scoped, tag = 'input window, operand 0']
    #allocation3 [shape = 's32[2]{0}', space=sflag, size = 0x8, scoped, tag = 'scoped memory for tpu_custom_call.1']
    #allocation4 [shape = 's32[2]{0}', space=sflag, size = 0x8, scoped, tag = 'scoped memory for tpu_custom_call.1']
    #allocation5 [shape = 'u8[24576]{0}', space=vmem, size = 0x6000, scoped, tag = 'input window, operand 1, single buffered']
    #allocation6 [shape = 's32[1]{0}', space=sflag, size = 0x4, scoped, tag = 'scoped memory for tpu_custom_call.1']
    #allocation7 [shape = 'u8[8192]{0}', space=vmem, size = 0x2000, scoped, tag = 'output window, operand 0']
    %7 = vsyncpa [#allocation3], 0
    %s8 = scalar_lea.sflag [#allocation3], 1
    %9 = vsyncpa %s8, 0
    %10 = vsyncpa [#allocation6], 0
    %11 = vsyncpa [#allocation4], 0
    %s12 = scalar_lea.sflag [#allocation4], 1
    %13 = vsyncpa %s12, 0
    loop: start=0, step=1, limit=4
    $region2: #{tpu_custom_call.1} parent=1 // loop_pre_header
      _
    $region3: #{tpu_custom_call.1} parent=1 // loop_header
      %s15 = sphi 0, %s19
      %p16 = scmp.ge.s32.totalorder %s15, 4
      %s25 = sphi 0, %s27
      %s28 = sphi 0, %s25
      %s29 = sphi 0, %s28
      %s45 = sphi 0, %s29
      %s49 = sphi 0, %s49
      %s51 = sphi 0, %s49
      %s52 = sphi 0, %s51
      %s66 = sphi 0, %s52
      %s72 = sphi 0, %s74
      %s75 = sphi 0, %s72
      %s76 = sphi 0, %s75
      %s92 = sphi 0, %s76
    $region4: #{tpu_custom_call.1} parent=1 // loop_header_branch
      %18 = sbr.rel (%p16) target = $region8
    $region5: #{tpu_custom_call.1} parent=1 // loop_body
      %s20 = ssub.s32 %s15, 1
      %s21 = ssub.s32 %s15, 2
      %s22 = sadd.s32 %s15, 1
      %s23 = ssub.s32 %s15, %s22
      %p24 = scmp.eq.s32.totalorder %s23, 0
      %s26 = sadd.s32 %s25, 1
      %s27 = scalar_select %p24, %s25, %s26
      %p30 = pneg %p24
      %p31 = scmp.eq.s32.totalorder %s15, 1
      %p32 = por %p30, %p31
      %p33 = scmp.ne.s32.totalorder %s25, %s28
      %p34 = scmp.eq.s32.totalorder %s15, 0
      %p35 = por %p33, %p34
      %p36 = scmp.ne.s32.totalorder %s25, %s28
      %p37 = scmp.eq.s32.totalorder %s20, 1
      %p38 = por %p36, %p37
      %p39 = scmp.ne.s32.totalorder %s28, %s29
      %p40 = scmp.eq.s32.totalorder %s20, 0
      %p41 = por %p39, %p40
      %p42 = scmp.ne.s32.totalorder %s28, %s29
      %p43 = scmp.eq.s32.totalorder %s21, 1
      %p44 = por %p42, %p43
      %p46 = scmp.ne.s32.totalorder %s29, %s45
      %p47 = scmp.eq.s32.totalorder %s21, 0
      %p48 = por %p46, %p47
      %s50 = sadd.s32 %s49, 1
      %p53 = scmp.eq.s32.totalorder %s15, 1
      %p54 = scmp.ne.s32.totalorder %s49, %s51
      %p55 = scmp.eq.s32.totalorder %s15, 0
      %p56 = por %p54, %p55
      %p57 = scmp.ne.s32.totalorder %s49, %s51
      %p58 = scmp.eq.s32.totalorder %s20, 1
      %p59 = por %p57, %p58
      %p60 = scmp.ne.s32.totalorder %s51, %s52
      %p61 = scmp.eq.s32.totalorder %s20, 0
      %p62 = por %p60, %p61
      %p63 = scmp.ne.s32.totalorder %s51, %s52
      %p64 = scmp.eq.s32.totalorder %s21, 1
      %p65 = por %p63, %p64
      %p67 = scmp.ne.s32.totalorder %s52, %s66
      %p68 = scmp.eq.s32.totalorder %s21, 0
      %p69 = por %p67, %p68
      %s70 = ssub.s32 %s15, %s22
      %p71 = scmp.eq.s32.totalorder %s70, 0
      %s73 = sadd.s32 %s72, 1
      %s74 = scalar_select %p71, %s72, %s73
      %p77 = pneg %p71
      %p78 = scmp.eq.s32.totalorder %s15, 1
      %p79 = por %p77, %p78
      %p80 = scmp.ne.s32.totalorder %s72, %s75
      %p81 = scmp.eq.s32.totalorder %s15, 0
      %p82 = por %p80, %p81
      %p83 = scmp.ne.s32.totalorder %s72, %s75
      %p84 = scmp.eq.s32.totalorder %s20, 1
      %p85 = por %p83, %p84
      %p86 = scmp.ne.s32.totalorder %s75, %s76
      %p87 = scmp.eq.s32.totalorder %s20, 0
      %p88 = por %p86, %p87
      %p89 = scmp.ne.s32.totalorder %s75, %s76
      %p90 = scmp.eq.s32.totalorder %s21, 1
      %p91 = por %p89, %p90
      %p93 = scmp.ne.s32.totalorder %s76, %s92
      %p94 = scmp.eq.s32.totalorder %s21, 0
      %p95 = por %p93, %p94
      %p96 = scmp.le.s32.totalorder 1, %s15
      %p97 = scmp.lt.s32.totalorder %s15, 3
      %p98 = pnand %p96, %p97
      %p99 = pneg %p98
      // Predicated region
      $region9: #{tpu_custom_call.1} parent=5 // pred_check
        _
      $region10: #{tpu_custom_call.1} parent=5 // pred_check_branch
        %101 = sbr.rel (%p98) target = $region12
      $region11: #{tpu_custom_call.1} parent=5 // pred_region
        %s102 = ssub.s32 %s15, 1
        // Predicated region
        $region13: #{tpu_custom_call.1} parent=11 // pred_check
          %p103 = pneg %p62
        $region14: #{tpu_custom_call.1} parent=11 // pred_check_branch
          %105 = sbr.rel (%p103) target = $region16
        $region15: #{tpu_custom_call.1} parent=11 // pred_region
          %s107 = ssub.s32 768, 768
          %108 = vsyncadd [#allocation6], %s107
          %s109 = sshll.u32 [#allocation5], 4
          %s110 = int_to_ptr.vmem [resolvable:$true] %s109
          %115 = dma.hbm_to_vmem [thread:$0]  %s1, 768, %s110, [#allocation6], 128, 128, 8
        $region16: #{tpu_custom_call.1} parent=11 // pred_fallthru
          _
      $region12: #{tpu_custom_call.1} parent=5 // pred_fallthru
        _
      %p116 = scmp.lt.s32.totalorder %s15, 2
      // Predicated region
      $region17: #{tpu_custom_call.1} parent=5 // pred_check
        %p117 = pneg %p116
      $region18: #{tpu_custom_call.1} parent=5 // pred_check_branch
        %119 = sbr.rel (%p117) target = $region20
      $region19: #{tpu_custom_call.1} parent=5 // pred_region
        // Predicated region
        $region21: #{tpu_custom_call.1} parent=19 // pred_check
          %p120 = pneg %p35
        $region22: #{tpu_custom_call.1} parent=19 // pred_check_branch
          %122 = sbr.rel (%p120) target = $region24
        $region23: #{tpu_custom_call.1} parent=19 // pred_region
          %s123 = sand.u32 %s25, 1
          %s124 = scalar_lea.sflag [#allocation3], %s123
          %s125 = sand.u32 %s25, 1
          %s126 = smul.addr %s125, 8
          %s127 = scalar_lea.vmem [#allocation2], %s126
          %s129 = ssub.s32 128, 128
          %130 = vsyncadd %s124, %s129
          %s131 = smul.addr %s15, 128
          %s132 = scalar_lea.hbm %s0, %s131
          %s134 = sshll.u32 %s127, 4
          %s135 = int_to_ptr.vmem [resolvable:$true] %s134
          %137 = dma.hbm_to_vmem [thread:$0]  %s132, 128, %s135, %s124
        $region24: #{tpu_custom_call.1} parent=19 // pred_fallthru
          _
      $region20: #{tpu_custom_call.1} parent=5 // pred_fallthru
        _
      %p138 = scmp.le.s32.totalorder 1, %s15
      %p139 = scmp.lt.s32.totalorder %s15, 3
      %p140 = pnand %p138, %p139
      %p141 = pneg %p140
      // Predicated region
      $region25: #{tpu_custom_call.1} parent=5 // pred_check
        _
      $region26: #{tpu_custom_call.1} parent=5 // pred_check_branch
        %143 = sbr.rel (%p140) target = $region28
      $region27: #{tpu_custom_call.1} parent=5 // pred_region
        %s144 = ssub.s32 %s15, 1
        %s145 = sand.u32 %s28, 1
        %s146 = scalar_lea.sflag [#allocation3], %s145
        %s147 = sand.u32 %s28, 1
        %s148 = smul.addr %s147, 8
        %s149 = scalar_lea.vmem [#allocation2], %s148
        // Predicated region
        $region29: #{tpu_custom_call.1} parent=27 // pred_check
          %p150 = pneg %p41
        $region30: #{tpu_custom_call.1} parent=27 // pred_check_branch
          %152 = sbr.rel (%p150) target = $region32
        $region31: #{tpu_custom_call.1} parent=27 // pred_region
          %153 = dma.done %s146, 128
        $region32: #{tpu_custom_call.1} parent=27 // pred_fallthru
          _
        // Predicated region
        $region33: #{tpu_custom_call.1} parent=27 // pred_check
          %p154 = pneg %p62
        $region34: #{tpu_custom_call.1} parent=27 // pred_check_branch
          %156 = sbr.rel (%p154) target = $region36
        $region35: #{tpu_custom_call.1} parent=27 // pred_region
          %157 = dma.done [#allocation6], 768
        $region36: #{tpu_custom_call.1} parent=27 // pred_fallthru
          _
        %s158 = sand.u32 %s28, 1
        %s159 = scalar_lea.sflag [#allocation3], %s158
        %s160 = sand.u32 %s28, 1
        %s161 = smul.addr %s160, 8
        %s162 = scalar_lea.vmem [#allocation2], %s161
        %p163 = pneg %p41
        %p164 = pneg %p38
        %p165 = pneg %p62
        %p166 = pneg %p59
        %p167 = pneg %p88
        %p168 = pneg %p85
        %s169 = sand.u32 %s75, 1
        %s170 = scalar_lea.sflag [#allocation4], %s169
        %s171 = sand.u32 %s75, 1
        %s172 = smul.addr %s171, 8
        %s173 = scalar_lea.vmem [#allocation7], %s172
        %v174 = vld [vmem:[%s149] sm:$0xff]
        %v175 = vld [vmem:[#allocation5] sm:$0xff]
        %v176 = vld [vmem:[#allocation5 + $0x8] sm:$0xff]
        %v177 = vld [vmem:[#allocation5 + $0x10] sm:$0xff]
        %v178 = vld [vmem:[#allocation5 + $0x18] sm:$0xff]
        %v179 = vld [vmem:[#allocation5 + $0x20] sm:$0xff]
        %v180 = vld [vmem:[#allocation5 + $0x28] sm:$0xff]
        %vm181 = vcmask 392192
        %v183 = vsel %vm181, %v174, 0
        %185 = vmatprep.subr.mxu0 0.0
        %186 = vmatpush1.msra.mxu0 0.0
        %187 = vmatprep.subr.mxu0 0.0
        %188 = vmatpush1.msra.mxu0 0.0
        %189 = vmatprep.subr.mxu0 0.0
        %190 = vmatpush1.msra.mxu0 0.0
        %191 = vmatprep.subr.mxu0 0.0
        %192 = vmatpush1.msra.mxu0 0.0
        %193 = vmatprep.subr.mxu0 0.0
        %194 = vmatpush1.msra.mxu0 0.0
        %195 = vmatprep.subr.mxu0 0.0
        %196 = vmatpush1.msra.mxu0 0.0
        %197 = vmatprep.subr.mxu0 0.0
        %198 = vmatpush1.msra.mxu0 0.0
        %199 = vmatprep.subr.mxu0 0.0
        %200 = vmatpush1.msra.mxu0 0.0
        %201 = vmatprep.subr.mxu0 0.0
        %202 = vmatpush1.msra.mxu0 0.0
        %203 = vmatprep.subr.mxu0 0.0
        %204 = vmatpush1.msra.mxu0 0.0
        %205 = vmatprep.subr.mxu0 0.0
        %206 = vmatpush1.msra.mxu0 %v180
        %207 = vmatprep.subr.mxu0 0.0
        %208 = vmatpush1.msra.mxu0 %v179
        %209 = vmatprep.subr.mxu0 0.0
        %210 = vmatpush1.msra.mxu0 %v178
        %211 = vmatprep.subr.mxu0 0.0
        %212 = vmatpush1.msra.mxu0 %v177
        %213 = vmatprep.subr.mxu0 0.0
        %214 = vmatpush1.msra.mxu0 %v176
        %215 = vmatprep.subr.mxu0 0.0
        %216 = vmatpush1.msra.mxu0 %v175
        %217 = vmatprep.subr.mxu0 0.0
        %218 = vmatpush2.msra.mxu0 0.0
        %219 = vmatprep.subr.mxu0 0.0
        %220 = vmatpush2.msra.mxu0 0.0
        %221 = vmatprep.subr.mxu0 0.0
        %222 = vmatpush2.msra.mxu0 0.0
        %223 = vmatprep.subr.mxu0 0.0
        %224 = vmatpush2.msra.mxu0 0.0
        %225 = vmatprep.subr.mxu0 0.0
        %226 = vmatpush2.msra.mxu0 0.0
        %227 = vmatprep.subr.mxu0 0.0
        %228 = vmatpush2.msra.mxu0 0.0
        %229 = vmatprep.subr.mxu0 0.0
        %230 = vmatpush2.msra.mxu0 0.0
        %231 = vmatprep.subr.mxu0 0.0
        %232 = vmatpush2.msra.mxu0 0.0
        %233 = vmatprep.subr.mxu0 0.0
        %234 = vmatpush2.msra.mxu0 0.0
        %235 = vmatprep.subr.mxu0 0.0
        %236 = vmatpush2.msra.mxu0 0.0
        %237 = vmatprep.subr.mxu0 0.0
        %238 = vmatpush2.msra.mxu0 0.0
        %239 = vmatprep.subr.mxu0 0.0
        %240 = vmatpush2.msra.mxu0 0.0
        %241 = vmatprep.subr.mxu0 0.0
        %242 = vmatpush2.msra.mxu0 0.0
        %243 = vmatprep.subr.mxu0 0.0
        %244 = vmatpush2.msra.mxu0 0.0
        %245 = vmatprep.subr.mxu0 0.0
        %246 = vmatpush2.msra.mxu0 0.0
        %247 = vmatprep.subr.mxu0 0.0
        %248 = vmatpush2.msra.mxu0 0.0
        %249 = vmatprep.mubr.f32.mxu0 0.0
        %250 = vmatmul.mubr.f32.gmra.mxu0 %v183
        %v251 = vpop.f32.mrf.mxu0
        %v252 = vadd.f32 0.0, %v251
        %v253 = vpop.f32.mrf.mxu0
        %254 = vdwg.mxu0
        %255 = vst [vmem:[%s173] sm:$0xff] %v252
        %s256 = sand.u32 %s75, 1
        %s257 = scalar_lea.sflag [#allocation4], %s256
        %s258 = sand.u32 %s75, 1
        %s259 = smul.addr %s258, 8
        %s260 = scalar_lea.vmem [#allocation7], %s259
        // Predicated region
        $region37: #{tpu_custom_call.1} parent=27 // pred_check
          %p261 = pneg %p85
        $region38: #{tpu_custom_call.1} parent=27 // pred_check_branch
          %263 = sbr.rel (%p261) target = $region40
        $region39: #{tpu_custom_call.1} parent=27 // pred_region
          %s265 = ssub.s32 128, 128
          %266 = vsyncadd %s257, %s265
          %s267 = smul.addr %s20, 128
          %s268 = scalar_lea.hbm %s2, %s267
          %s270 = sshll.u32 %s260, 4
          %s271 = int_to_ptr.vmem [resolvable:$true] %s270
          %273 = dma.vmem_to_hbm [thread:$0]  %s271, 128, %s268, %s257
        $region40: #{tpu_custom_call.1} parent=27 // pred_fallthru
          _
      $region28: #{tpu_custom_call.1} parent=5 // pred_fallthru
        _
      %p274 = scmp.le.s32.totalorder 2, %s15
      // Predicated region
      $region41: #{tpu_custom_call.1} parent=5 // pred_check
        %p275 = pneg %p274
      $region42: #{tpu_custom_call.1} parent=5 // pred_check_branch
        %277 = sbr.rel (%p275) target = $region44
      $region43: #{tpu_custom_call.1} parent=5 // pred_region
        %s278 = ssub.s32 %s15, 2
        // Predicated region
        $region45: #{tpu_custom_call.1} parent=43 // pred_check
          %p279 = pneg %p91
        $region46: #{tpu_custom_call.1} parent=43 // pred_check_branch
          %281 = sbr.rel (%p279) target = $region48
        $region47: #{tpu_custom_call.1} parent=43 // pred_region
          %s282 = sand.u32 %s76, 1
          %s283 = scalar_lea.sflag [#allocation4], %s282
          %s284 = sand.u32 %s76, 1
          %s285 = smul.addr %s284, 8
          %s286 = scalar_lea.vmem [#allocation7], %s285
          %287 = dma.done %s283, 128
        $region48: #{tpu_custom_call.1} parent=43 // pred_fallthru
          _
      $region44: #{tpu_custom_call.1} parent=5 // pred_fallthru
        _
    $region6: #{tpu_custom_call.1} parent=1 // loop_footer
      %s19 = sadd.s32 1, %s15
    $region7: #{tpu_custom_call.1} parent=1 // loop_footer_branch
      %14 = sbr.rel target = $region3
    $region8: #{tpu_custom_call.1} parent=1 // loop_exit
      _
    %288 = vsyncpa [#allocation3], 1
    %s289 = scalar_lea.sflag [#allocation3], 1
    %290 = vsyncpa %s289, 1
    %291 = vsyncpa [#allocation6], 1
    %292 = vsyncpa [#allocation4], 1
    %s293 = scalar_lea.sflag [#allocation4], 1
    %294 = vsyncpa %s293, 1

</llo_original>
